<compile_context>
chip_gen: v6e
topology: v6e:2x2x1
jax: 0.10.0
libtpu: 0.0.40
codegen_flags: <defaults>
</compile_context>

<pallas_src>
import functools

import jax
import jax.numpy as jnp
from jax.experimental import pallas as pl
from jax.experimental.pallas import tpu as pltpu


def fused_lstm_kernel(w_ih_ref, w_hh_ref, b_ref, x_ref, out_ref, *,
                      n_ts, hidden, seq_len, batch):
    """All timeseries LSTMs fused via block-diagonal weights.

    Ref shapes:
      w_ih_ref : (n_ts*F, 4*G)   block-diag, columns = [i | f | o | g], each G=n_ts*H wide
      w_hh_ref : (G, 4*G)        block-diag, same column layout
      b_ref    : (1, 4*G)        bias_ih + bias_hh, same column layout
      x_ref    : (T*B, n_ts*F)   time-major flattened input (row = t*B + b)
      out_ref  : (B, G)          last hidden state, already in torch.cat(dim=1) layout
    """
    G = n_ts * hidden
    T = seq_len
    B = batch  # padded batch (multiple of 8)

    w_ih = w_ih_ref[...]
    w_hh = w_hh_ref[...]
    b = b_ref[...]
    x = x_ref[...]

    # Input contribution for every timestep of every timeseries in one MXU pass: (T*B, 4G).
    xg = jnp.dot(x, w_ih, preferred_element_type=jnp.float32) + b

    h = jnp.zeros((B, G), jnp.float32)
    c = jnp.zeros((B, G), jnp.float32)

    # T is small & static -> unrolled Python loop; all slices are static and sublane-aligned.
    for t in range(T):
        gates = xg[t * B:(t + 1) * B, :] + jnp.dot(
            h, w_hh, preferred_element_type=jnp.float32)        # (B, 4G)
        sig = jax.nn.sigmoid(gates[:, :3 * G])                   # i|f|o : one EUP pass
        g_g = jnp.tanh(gates[:, 3 * G:])                         # g     : one EUP pass
        i_g = sig[:, 0 * G:1 * G]
        f_g = sig[:, 1 * G:2 * G]
        o_g = sig[:, 2 * G:3 * G]
        c = f_g * c + i_g * g_g
        h = o_g * jnp.tanh(c)

    out_ref[...] = h.astype(out_ref.dtype)


def timeseries_encoder_lstm(x, w_ih, w_hh, b_ih, b_hh, *, n_timeseries, n_features, hidden):
    """x: [B, T, n_timeseries * n_features] float32.

    w_ih: [n_ts, 4H, F], w_hh: [n_ts, 4H, H], b_ih/b_hh: [n_ts, 4H]  (PyTorch gate order i,f,g,o)
    Returns [B, n_timeseries * hidden] (concat of per-timeseries last hidden states).
    """
    B, T, nF = x.shape
    F, H, n_ts = n_features, hidden, n_timeseries
    assert nF == n_ts * F
    G = n_ts * H

    # ---------- host-side layout plumbing (tiny, done once outside the kernel) ----------
    # Gate reorder i,f,g,o -> i,f,o,g (rows of weights and BOTH biases, consistently).
    perm = jnp.concatenate([jnp.arange(0, H), jnp.arange(H, 2 * H),
                            jnp.arange(3 * H, 4 * H), jnp.arange(2 * H, 3 * H)])
    w_ih_r = w_ih[:, perm, :]                      # [n_ts, 4H, F]
    w_hh_r = w_hh[:, perm, :]                      # [n_ts, 4H, H]
    b_r = (b_ih + b_hh)[:, perm]                   # [n_ts, 4H]

    # Block-diagonal fused weights. Column index = gate*G + ts*H + h_out
    # (gate-major, timeseries-major within each gate block).
    w_ih_bd = jnp.zeros((n_ts * F, 4, n_ts, H), jnp.float32)
    w_hh_bd = jnp.zeros((G, 4, n_ts, H), jnp.float32)
    for j in range(n_ts):
        wj = jnp.transpose(w_ih_r[j].reshape(4, H, F), (2, 0, 1))   # [F, 4, H]
        w_ih_bd = w_ih_bd.at[j * F:(j + 1) * F, :, j, :].set(wj)
        vj = jnp.transpose(w_hh_r[j].reshape(4, H, H), (2, 0, 1))   # [H_in, 4, H_out]
        w_hh_bd = w_hh_bd.at[j * H:(j + 1) * H, :, j, :].set(vj)
    w_ih_bd = w_ih_bd.reshape(n_ts * F, 4 * G)
    w_hh_bd = w_hh_bd.reshape(G, 4 * G)
    b_bd = jnp.transpose(b_r.reshape(n_ts, 4, H), (1, 0, 2)).reshape(1, 4 * G)

    # Time-major flattened input (row = t*B_pad + b); pad batch to a sublane multiple of 8 so
    # every per-timestep row slice inside the kernel is tile-aligned.
    B_pad = ((B + 7) // 8) * 8
    x_tm = jnp.transpose(x, (1, 0, 2))             # [T, B, n_ts*F]
    if B_pad != B:
        x_tm = jnp.pad(x_tm, ((0, 0), (0, B_pad - B), (0, 0)))
    x_tm = x_tm.reshape(T * B_pad, nF)

    kernel = functools.partial(fused_lstm_kernel, n_ts=n_ts, hidden=H,
                               seq_len=T, batch=B_pad)

    out = pl.pallas_call(
        kernel,
        out_shape=jax.ShapeDtypeStruct((B_pad, G), jnp.float32),
        grid=(1,),
        in_specs=[
            pl.BlockSpec((n_ts * F, 4 * G), lambda i: (0, 0)),
            pl.BlockSpec((G, 4 * G), lambda i: (0, 0)),
            pl.BlockSpec((1, 4 * G), lambda i: (0, 0)),
            pl.BlockSpec((T * B_pad, nF), lambda i: (0, 0)),
        ],
        out_specs=pl.BlockSpec((B_pad, G), lambda i: (0, 0)),
        compiler_params=pltpu.CompilerParams(dimension_semantics=("arbitrary",)),
    )(w_ih_bd, w_hh_bd, b_bd, x_tm)

    # Output is already [B_pad, n_ts*H] in torch.cat(dim=1) order; just drop batch padding.
    return out[:B]


def _reference_lstm_last_hidden(x_i, w_ih, w_hh, b_ih, b_hh, hidden):
    """Pure-JAX reference for one timeseries (PyTorch LSTM semantics, gate order i,f,g,o)."""
    B, T, F = x_i.shape
    H = hidden
    h = jnp.zeros((B, H), jnp.float32)
    c = jnp.zeros((B, H), jnp.float32)
    for t in range(T):
        gates = x_i[:, t, :] @ w_ih.T + b_ih + h @ w_hh.T + b_hh
        i_g = jax.nn.sigmoid(gates[:, 0 * H:1 * H])
        f_g = jax.nn.sigmoid(gates[:, 1 * H:2 * H])
        g_g = jnp.tanh(gates[:, 2 * H:3 * H])
        o_g = jax.nn.sigmoid(gates[:, 3 * H:4 * H])
        c = f_g * c + i_g * g_g
        h = o_g * jnp.tanh(c)
    return h


if __name__ == "__main__":
    # Small shapes consistent with the module's forward.
    batch = 2
    n_features = 4
    n_previous_timesteps = 7          # -> seq_len = 8
    seq_len = n_previous_timesteps + 1
    n_timeseries = 2
    hidden = 32                       # n_neurons (LSTM hidden size); 4*n_ts*H = 256

    key = jax.random.PRNGKey(0)
    k_x, k_wih, k_whh, k_bih, k_bhh = jax.random.split(key, 5)

    # Deterministic synthetic parameters (PyTorch-style uniform(-1/sqrt(H), 1/sqrt(H))).
    bound = 1.0 / jnp.sqrt(jnp.float32(hidden))
    w_ih = jax.random.uniform(k_wih, (n_timeseries, 4 * hidden, n_features),
                              jnp.float32, -bound, bound)
    w_hh = jax.random.uniform(k_whh, (n_timeseries, 4 * hidden, hidden),
                              jnp.float32, -bound, bound)
    b_ih = jax.random.uniform(k_bih, (n_timeseries, 4 * hidden), jnp.float32, -bound, bound)
    b_hh = jax.random.uniform(k_bhh, (n_timeseries, 4 * hidden), jnp.float32, -bound, bound)

    x = jax.random.normal(k_x, (batch, seq_len, n_timeseries * n_features), jnp.float32)

    out = timeseries_encoder_lstm(
        x, w_ih, w_hh, b_ih, b_hh,
        n_timeseries=n_timeseries, n_features=n_features, hidden=hidden)
    out = jax.block_until_ready(out)
    assert out.shape == (batch, n_timeseries * hidden)

    # Pure-JAX reference check (same semantics as torch.nn.LSTM last-step output + cat(dim=1)).
    refs = []
    for i in range(n_timeseries):
        xi = x[:, :, n_features * i:n_features * (i + 1)]
        refs.append(_reference_lstm_last_hidden(xi, w_ih[i], w_hh[i], b_ih[i], b_hh[i], hidden))
    ref = jnp.concatenate(refs, axis=1)
    assert jnp.allclose(out, ref, atol=2e-3, rtol=2e-3), float(jnp.max(jnp.abs(out - ref)))

    print("KERNEL_OK")
</pallas_src>

<mosaic_0001>
module attributes {stable_mosaic.version = 11 : i64} {
  func.func @fused_lstm_kernel(%arg0: i32, %arg1: memref<8x256xf32, #tpu.memory_space<vmem>>, %arg2: memref<64x256xf32, #tpu.memory_space<vmem>>, %arg3: memref<1x256xf32, #tpu.memory_space<vmem>>, %arg4: memref<64x8xf32, #tpu.memory_space<vmem>>, %arg5: memref<8x64xf32, #tpu.memory_space<vmem>>) attributes {dimension_semantics = [#tpu.dimension_semantics<arbitrary>], iteration_bounds = array<i64: 1>, scalar_prefetch = 0 : i64, scratch_operands = 0 : i64, tpu.core_type = #tpu.core_type<tc>, window_params = [{pipeline_mode = #tpu.pipeline_mode<synchronous>, transform_indices = @transform_0, window_bounds = array<i64: 8, 256>}, {pipeline_mode = #tpu.pipeline_mode<synchronous>, transform_indices = @transform_1, window_bounds = array<i64: 64, 256>}, {pipeline_mode = #tpu.pipeline_mode<synchronous>, transform_indices = @transform_2, window_bounds = array<i64: 1, 256>}, {pipeline_mode = #tpu.pipeline_mode<synchronous>, transform_indices = @transform_3, window_bounds = array<i64: 64, 8>}, {pipeline_mode = #tpu.pipeline_mode<synchronous>, transform_indices = @transform_4, window_bounds = array<i64: 8, 64>}]} {
    %c0 = arith.constant 0 : index
    %c0_0 = arith.constant 0 : index
    %0 = vector.load %arg1[%c0, %c0_0] : memref<8x256xf32, #tpu.memory_space<vmem>>, vector<8x256xf32>
    %c0_1 = arith.constant 0 : index
    %c0_2 = arith.constant 0 : index
    %1 = vector.load %arg2[%c0_1, %c0_2] : memref<64x256xf32, #tpu.memory_space<vmem>>, vector<64x256xf32>
    %c0_3 = arith.constant 0 : index
    %c0_4 = arith.constant 0 : index
    %2 = vector.load %arg3[%c0_3, %c0_4] : memref<1x256xf32, #tpu.memory_space<vmem>>, vector<1x256xf32>
    %c0_5 = arith.constant 0 : index
    %c0_6 = arith.constant 0 : index
    %3 = vector.load %arg4[%c0_5, %c0_6] : memref<64x8xf32, #tpu.memory_space<vmem>>, vector<64x8xf32>
    %cst = arith.constant dense<0.000000e+00> : vector<64x256xf32>
    %4 = tpu.matmul %3, %0, %cst {dimension_numbers = #tpu.dot_dimension_numbers<[1], [0], [0], [1], [0, 0, 1, 1], [], []>} : vector<64x8xf32>, vector<8x256xf32>, vector<64x256xf32> -> vector<64x256xf32>
    %5 = vector.broadcast %2 : vector<1x256xf32> to vector<64x256xf32>
    %6 = arith.addf %4, %5 : vector<64x256xf32>
    %cst_7 = arith.constant 0.000000e+00 : f32
    %7 = vector.broadcast %cst_7 : f32 to vector<8x64xf32>
    %cst_8 = arith.constant 0.000000e+00 : f32
    %8 = vector.broadcast %cst_8 : f32 to vector<8x64xf32>
    %9 = vector.extract_strided_slice %6 {offsets = [0, 0], sizes = [8, 256], strides = [1, 1]} : vector<64x256xf32> to vector<8x256xf32>
    %cst_9 = arith.constant dense<0.000000e+00> : vector<8x256xf32>
    %10 = tpu.matmul %7, %1, %cst_9 {dimension_numbers = #tpu.dot_dimension_numbers<[1], [0], [0], [1], [0, 0, 1, 1], [], []>} : vector<8x64xf32>, vector<64x256xf32>, vector<8x256xf32> -> vector<8x256xf32>
    %11 = arith.addf %9, %10 : vector<8x256xf32>
    %12 = vector.extract_strided_slice %11 {offsets = [0, 0], sizes = [8, 192], strides = [1, 1]} : vector<8x256xf32> to vector<8x192xf32>
    %13 = arith.negf %12 : vector<8x192xf32>
    %14 = math.exp %13 : vector<8x192xf32>
    %cst_10 = arith.constant 1.000000e+00 : f32
    %15 = vector.broadcast %cst_10 : f32 to vector<8x192xf32>
    %16 = arith.addf %15, %14 : vector<8x192xf32>
    %17 = arith.divf %15, %16 : vector<8x192xf32>
    %18 = vector.extract_strided_slice %11 {offsets = [0, 192], sizes = [8, 64], strides = [1, 1]} : vector<8x256xf32> to vector<8x64xf32>
    %19 = math.tanh %18 : vector<8x64xf32>
    %20 = vector.extract_strided_slice %17 {offsets = [0, 0], sizes = [8, 64], strides = [1, 1]} : vector<8x192xf32> to vector<8x64xf32>
    %21 = vector.extract_strided_slice %17 {offsets = [0, 64], sizes = [8, 64], strides = [1, 1]} : vector<8x192xf32> to vector<8x64xf32>
    %22 = vector.extract_strided_slice %17 {offsets = [0, 128], sizes = [8, 64], strides = [1, 1]} : vector<8x192xf32> to vector<8x64xf32>
    %23 = arith.mulf %21, %8 : vector<8x64xf32>
    %24 = arith.mulf %20, %19 : vector<8x64xf32>
    %25 = arith.addf %23, %24 : vector<8x64xf32>
    %26 = math.tanh %25 : vector<8x64xf32>
    %27 = arith.mulf %22, %26 : vector<8x64xf32>
    %28 = vector.extract_strided_slice %6 {offsets = [8, 0], sizes = [8, 256], strides = [1, 1]} : vector<64x256xf32> to vector<8x256xf32>
    %cst_11 = arith.constant dense<0.000000e+00> : vector<8x256xf32>
    %29 = tpu.matmul %27, %1, %cst_11 {dimension_numbers = #tpu.dot_dimension_numbers<[1], [0], [0], [1], [0, 0, 1, 1], [], []>} : vector<8x64xf32>, vector<64x256xf32>, vector<8x256xf32> -> vector<8x256xf32>
    %30 = arith.addf %28, %29 : vector<8x256xf32>
    %31 = vector.extract_strided_slice %30 {offsets = [0, 0], sizes = [8, 192], strides = [1, 1]} : vector<8x256xf32> to vector<8x192xf32>
    %32 = arith.negf %31 : vector<8x192xf32>
    %33 = math.exp %32 : vector<8x192xf32>
    %cst_12 = arith.constant 1.000000e+00 : f32
    %34 = vector.broadcast %cst_12 : f32 to vector<8x192xf32>
    %35 = arith.addf %34, %33 : vector<8x192xf32>
    %36 = arith.divf %34, %35 : vector<8x192xf32>
    %37 = vector.extract_strided_slice %30 {offsets = [0, 192], sizes = [8, 64], strides = [1, 1]} : vector<8x256xf32> to vector<8x64xf32>
    %38 = math.tanh %37 : vector<8x64xf32>
    %39 = vector.extract_strided_slice %36 {offsets = [0, 0], sizes = [8, 64], strides = [1, 1]} : vector<8x192xf32> to vector<8x64xf32>
    %40 = vector.extract_strided_slice %36 {offsets = [0, 64], sizes = [8, 64], strides = [1, 1]} : vector<8x192xf32> to vector<8x64xf32>
    %41 = vector.extract_strided_slice %36 {offsets = [0, 128], sizes = [8, 64], strides = [1, 1]} : vector<8x192xf32> to vector<8x64xf32>
    %42 = arith.mulf %40, %25 : vector<8x64xf32>
    %43 = arith.mulf %39, %38 : vector<8x64xf32>
    %44 = arith.addf %42, %43 : vector<8x64xf32>
    %45 = math.tanh %44 : vector<8x64xf32>
    %46 = arith.mulf %41, %45 : vector<8x64xf32>
    %47 = vector.extract_strided_slice %6 {offsets = [16, 0], sizes = [8, 256], strides = [1, 1]} : vector<64x256xf32> to vector<8x256xf32>
    %cst_13 = arith.constant dense<0.000000e+00> : vector<8x256xf32>
    %48 = tpu.matmul %46, %1, %cst_13 {dimension_numbers = #tpu.dot_dimension_numbers<[1], [0], [0], [1], [0, 0, 1, 1], [], []>} : vector<8x64xf32>, vector<64x256xf32>, vector<8x256xf32> -> vector<8x256xf32>
    %49 = arith.addf %47, %48 : vector<8x256xf32>
    %50 = vector.extract_strided_slice %49 {offsets = [0, 0], sizes = [8, 192], strides = [1, 1]} : vector<8x256xf32> to vector<8x192xf32>
    %51 = arith.negf %50 : vector<8x192xf32>
    %52 = math.exp %51 : vector<8x192xf32>
    %cst_14 = arith.constant 1.000000e+00 : f32
    %53 = vector.broadcast %cst_14 : f32 to vector<8x192xf32>
    %54 = arith.addf %53, %52 : vector<8x192xf32>
    %55 = arith.divf %53, %54 : vector<8x192xf32>
    %56 = vector.extract_strided_slice %49 {offsets = [0, 192], sizes = [8, 64], strides = [1, 1]} : vector<8x256xf32> to vector<8x64xf32>
    %57 = math.tanh %56 : vector<8x64xf32>
    %58 = vector.extract_strided_slice %55 {offsets = [0, 0], sizes = [8, 64], strides = [1, 1]} : vector<8x192xf32> to vector<8x64xf32>
    %59 = vector.extract_strided_slice %55 {offsets = [0, 64], sizes = [8, 64], strides = [1, 1]} : vector<8x192xf32> to vector<8x64xf32>
    %60 = vector.extract_strided_slice %55 {offsets = [0, 128], sizes = [8, 64], strides = [1, 1]} : vector<8x192xf32> to vector<8x64xf32>
    %61 = arith.mulf %59, %44 : vector<8x64xf32>
    %62 = arith.mulf %58, %57 : vector<8x64xf32>
    %63 = arith.addf %61, %62 : vector<8x64xf32>
    %64 = math.tanh %63 : vector<8x64xf32>
    %65 = arith.mulf %60, %64 : vector<8x64xf32>
    %66 = vector.extract_strided_slice %6 {offsets = [24, 0], sizes = [8, 256], strides = [1, 1]} : vector<64x256xf32> to vector<8x256xf32>
    %cst_15 = arith.constant dense<0.000000e+00> : vector<8x256xf32>
    %67 = tpu.matmul %65, %1, %cst_15 {dimension_numbers = #tpu.dot_dimension_numbers<[1], [0], [0], [1], [0, 0, 1, 1], [], []>} : vector<8x64xf32>, vector<64x256xf32>, vector<8x256xf32> -> vector<8x256xf32>
    %68 = arith.addf %66, %67 : vector<8x256xf32>
    %69 = vector.extract_strided_slice %68 {offsets = [0, 0], sizes = [8, 192], strides = [1, 1]} : vector<8x256xf32> to vector<8x192xf32>
    %70 = arith.negf %69 : vector<8x192xf32>
    %71 = math.exp %70 : vector<8x192xf32>
    %cst_16 = arith.constant 1.000000e+00 : f32
    %72 = vector.broadcast %cst_16 : f32 to vector<8x192xf32>
    %73 = arith.addf %72, %71 : vector<8x192xf32>
    %74 = arith.divf %72, %73 : vector<8x192xf32>
    %75 = vector.extract_strided_slice %68 {offsets = [0, 192], sizes = [8, 64], strides = [1, 1]} : vector<8x256xf32> to vector<8x64xf32>
    %76 = math.tanh %75 : vector<8x64xf32>
    %77 = vector.extract_strided_slice %74 {offsets = [0, 0], sizes = [8, 64], strides = [1, 1]} : vector<8x192xf32> to vector<8x64xf32>
    %78 = vector.extract_strided_slice %74 {offsets = [0, 64], sizes = [8, 64], strides = [1, 1]} : vector<8x192xf32> to vector<8x64xf32>
    %79 = vector.extract_strided_slice %74 {offsets = [0, 128], sizes = [8, 64], strides = [1, 1]} : vector<8x192xf32> to vector<8x64xf32>
    %80 = arith.mulf %78, %63 : vector<8x64xf32>
    %81 = arith.mulf %77, %76 : vector<8x64xf32>
    %82 = arith.addf %80, %81 : vector<8x64xf32>
    %83 = math.tanh %82 : vector<8x64xf32>
    %84 = arith.mulf %79, %83 : vector<8x64xf32>
    %85 = vector.extract_strided_slice %6 {offsets = [32, 0], sizes = [8, 256], strides = [1, 1]} : vector<64x256xf32> to vector<8x256xf32>
    %cst_17 = arith.constant dense<0.000000e+00> : vector<8x256xf32>
    %86 = tpu.matmul %84, %1, %cst_17 {dimension_numbers = #tpu.dot_dimension_numbers<[1], [0], [0], [1], [0, 0, 1, 1], [], []>} : vector<8x64xf32>, vector<64x256xf32>, vector<8x256xf32> -> vector<8x256xf32>
    %87 = arith.addf %85, %86 : vector<8x256xf32>
    %88 = vector.extract_strided_slice %87 {offsets = [0, 0], sizes = [8, 192], strides = [1, 1]} : vector<8x256xf32> to vector<8x192xf32>
    %89 = arith.negf %88 : vector<8x192xf32>
    %90 = math.exp %89 : vector<8x192xf32>
    %cst_18 = arith.constant 1.000000e+00 : f32
    %91 = vector.broadcast %cst_18 : f32 to vector<8x192xf32>
    %92 = arith.addf %91, %90 : vector<8x192xf32>
    %93 = arith.divf %91, %92 : vector<8x192xf32>
    %94 = vector.extract_strided_slice %87 {offsets = [0, 192], sizes = [8, 64], strides = [1, 1]} : vector<8x256xf32> to vector<8x64xf32>
    %95 = math.tanh %94 : vector<8x64xf32>
    %96 = vector.extract_strided_slice %93 {offsets = [0, 0], sizes = [8, 64], strides = [1, 1]} : vector<8x192xf32> to vector<8x64xf32>
    %97 = vector.extract_strided_slice %93 {offsets = [0, 64], sizes = [8, 64], strides = [1, 1]} : vector<8x192xf32> to vector<8x64xf32>
    %98 = vector.extract_strided_slice %93 {offsets = [0, 128], sizes = [8, 64], strides = [1, 1]} : vector<8x192xf32> to vector<8x64xf32>
    %99 = arith.mulf %97, %82 : vector<8x64xf32>
    %100 = arith.mulf %96, %95 : vector<8x64xf32>
    %101 = arith.addf %99, %100 : vector<8x64xf32>
    %102 = math.tanh %101 : vector<8x64xf32>
    %103 = arith.mulf %98, %102 : vector<8x64xf32>
    %104 = vector.extract_strided_slice %6 {offsets = [40, 0], sizes = [8, 256], strides = [1, 1]} : vector<64x256xf32> to vector<8x256xf32>
    %cst_19 = arith.constant dense<0.000000e+00> : vector<8x256xf32>
    %105 = tpu.matmul %103, %1, %cst_19 {dimension_numbers = #tpu.dot_dimension_numbers<[1], [0], [0], [1], [0, 0, 1, 1], [], []>} : vector<8x64xf32>, vector<64x256xf32>, vector<8x256xf32> -> vector<8x256xf32>
    %106 = arith.addf %104, %105 : vector<8x256xf32>
    %107 = vector.extract_strided_slice %106 {offsets = [0, 0], sizes = [8, 192], strides = [1, 1]} : vector<8x256xf32> to vector<8x192xf32>
    %108 = arith.negf %107 : vector<8x192xf32>
    %109 = math.exp %108 : vector<8x192xf32>
    %cst_20 = arith.constant 1.000000e+00 : f32
    %110 = vector.broadcast %cst_20 : f32 to vector<8x192xf32>
    %111 = arith.addf %110, %109 : vector<8x192xf32>
    %112 = arith.divf %110, %111 : vector<8x192xf32>
    %113 = vector.extract_strided_slice %106 {offsets = [0, 192], sizes = [8, 64], strides = [1, 1]} : vector<8x256xf32> to vector<8x64xf32>
    %114 = math.tanh %113 : vector<8x64xf32>
    %115 = vector.extract_strided_slice %112 {offsets = [0, 0], sizes = [8, 64], strides = [1, 1]} : vector<8x192xf32> to vector<8x64xf32>
    %116 = vector.extract_strided_slice %112 {offsets = [0, 64], sizes = [8, 64], strides = [1, 1]} : vector<8x192xf32> to vector<8x64xf32>
    %117 = vector.extract_strided_slice %112 {offsets = [0, 128], sizes = [8, 64], strides = [1, 1]} : vector<8x192xf32> to vector<8x64xf32>
    %118 = arith.mulf %116, %101 : vector<8x64xf32>
    %119 = arith.mulf %115, %114 : vector<8x64xf32>
    %120 = arith.addf %118, %119 : vector<8x64xf32>
    %121 = math.tanh %120 : vector<8x64xf32>
    %122 = arith.mulf %117, %121 : vector<8x64xf32>
    %123 = vector.extract_strided_slice %6 {offsets = [48, 0], sizes = [8, 256], strides = [1, 1]} : vector<64x256xf32> to vector<8x256xf32>
    %cst_21 = arith.constant dense<0.000000e+00> : vector<8x256xf32>
    %124 = tpu.matmul %122, %1, %cst_21 {dimension_numbers = #tpu.dot_dimension_numbers<[1], [0], [0], [1], [0, 0, 1, 1], [], []>} : vector<8x64xf32>, vector<64x256xf32>, vector<8x256xf32> -> vector<8x256xf32>
    %125 = arith.addf %123, %124 : vector<8x256xf32>
    %126 = vector.extract_strided_slice %125 {offsets = [0, 0], sizes = [8, 192], strides = [1, 1]} : vector<8x256xf32> to vector<8x192xf32>
    %127 = arith.negf %126 : vector<8x192xf32>
    %128 = math.exp %127 : vector<8x192xf32>
    %cst_22 = arith.constant 1.000000e+00 : f32
    %129 = vector.broadcast %cst_22 : f32 to vector<8x192xf32>
    %130 = arith.addf %129, %128 : vector<8x192xf32>
    %131 = arith.divf %129, %130 : vector<8x192xf32>
    %132 = vector.extract_strided_slice %125 {offsets = [0, 192], sizes = [8, 64], strides = [1, 1]} : vector<8x256xf32> to vector<8x64xf32>
    %133 = math.tanh %132 : vector<8x64xf32>
    %134 = vector.extract_strided_slice %131 {offsets = [0, 0], sizes = [8, 64], strides = [1, 1]} : vector<8x192xf32> to vector<8x64xf32>
    %135 = vector.extract_strided_slice %131 {offsets = [0, 64], sizes = [8, 64], strides = [1, 1]} : vector<8x192xf32> to vector<8x64xf32>
    %136 = vector.extract_strided_slice %131 {offsets = [0, 128], sizes = [8, 64], strides = [1, 1]} : vector<8x192xf32> to vector<8x64xf32>
    %137 = arith.mulf %135, %120 : vector<8x64xf32>
    %138 = arith.mulf %134, %133 : vector<8x64xf32>
    %139 = arith.addf %137, %138 : vector<8x64xf32>
    %140 = math.tanh %139 : vector<8x64xf32>
    %141 = arith.mulf %136, %140 : vector<8x64xf32>
    %142 = vector.extract_strided_slice %6 {offsets = [56, 0], sizes = [8, 256], strides = [1, 1]} : vector<64x256xf32> to vector<8x256xf32>
    %cst_23 = arith.constant dense<0.000000e+00> : vector<8x256xf32>
    %143 = tpu.matmul %141, %1, %cst_23 {dimension_numbers = #tpu.dot_dimension_numbers<[1], [0], [0], [1], [0, 0, 1, 1], [], []>} : vector<8x64xf32>, vector<64x256xf32>, vector<8x256xf32> -> vector<8x256xf32>
    %144 = arith.addf %142, %143 : vector<8x256xf32>
    %145 = vector.extract_strided_slice %144 {offsets = [0, 0], sizes = [8, 192], strides = [1, 1]} : vector<8x256xf32> to vector<8x192xf32>
    %146 = arith.negf %145 : vector<8x192xf32>
    %147 = math.exp %146 : vector<8x192xf32>
    %cst_24 = arith.constant 1.000000e+00 : f32
    %148 = vector.broadcast %cst_24 : f32 to vector<8x192xf32>
    %149 = arith.addf %148, %147 : vector<8x192xf32>
    %150 = arith.divf %148, %149 : vector<8x192xf32>
    %151 = vector.extract_strided_slice %144 {offsets = [0, 192], sizes = [8, 64], strides = [1, 1]} : vector<8x256xf32> to vector<8x64xf32>
    %152 = math.tanh %151 : vector<8x64xf32>
    %153 = vector.extract_strided_slice %150 {offsets = [0, 0], sizes = [8, 64], strides = [1, 1]} : vector<8x192xf32> to vector<8x64xf32>
    %154 = vector.extract_strided_slice %150 {offsets = [0, 64], sizes = [8, 64], strides = [1, 1]} : vector<8x192xf32> to vector<8x64xf32>
    %155 = vector.extract_strided_slice %150 {offsets = [0, 128], sizes = [8, 64], strides = [1, 1]} : vector<8x192xf32> to vector<8x64xf32>
    %156 = arith.mulf %154, %139 : vector<8x64xf32>
    %157 = arith.mulf %153, %152 : vector<8x64xf32>
    %158 = arith.addf %156, %157 : vector<8x64xf32>
    %159 = math.tanh %158 : vector<8x64xf32>
    %160 = arith.mulf %155, %159 : vector<8x64xf32>
    %c0_25 = arith.constant 0 : index
    %c0_26 = arith.constant 0 : index
    %161 = vector.load %arg5[%c0_25, %c0_26] : memref<8x64xf32, #tpu.memory_space<vmem>>, vector<8x64xf32>
    tpu.vector_store %arg5[%c0_25, %c0_26], %160 {strides = array<i32>} : memref<8x64xf32, #tpu.memory_space<vmem>>, vector<8x64xf32>,
    return
  }
  func.func @transform_0(%arg0: i32) -> (i32, i32) {
    %c0_i32 = arith.constant 0 : i32
    %c0_i32_0 = arith.constant 0 : i32
    %c0_i32_1 = arith.constant 0 : i32
    return %c0_i32, %c0_i32_0 : i32, i32
  }
  func.func @transform_1(%arg0: i32) -> (i32, i32) {
    %c0_i32 = arith.constant 0 : i32
    %c0_i32_0 = arith.constant 0 : i32
    %c0_i32_1 = arith.constant 0 : i32
    return %c0_i32, %c0_i32_0 : i32, i32
  }
  func.func @transform_2(%arg0: i32) -> (i32, i32) {
    %c0_i32 = arith.constant 0 : i32
    %c0_i32_0 = arith.constant 0 : i32
    %c0_i32_1 = arith.constant 0 : i32
    return %c0_i32, %c0_i32_0 : i32, i32
  }
  func.func @transform_3(%arg0: i32) -> (i32, i32) {
    %c0_i32 = arith.constant 0 : i32
    %c0_i32_0 = arith.constant 0 : i32
    %c0_i32_1 = arith.constant 0 : i32
    return %c0_i32, %c0_i32_0 : i32, i32
  }
  func.func @transform_4(%arg0: i32) -> (i32, i32) {
    %c0_i32 = arith.constant 0 : i32
    %c0_i32_0 = arith.constant 0 : i32
    %c0_i32_1 = arith.constant 0 : i32
    return %c0_i32, %c0_i32_0 : i32, i32
  }
}

</mosaic_0001>

<llo_original>
// kernel: tpu_custom_call.1
$region0: #{tpu_custom_call.1}
  #allocation0 [shape = 'u32[]', space=smem, size = 0x4, offset = 0x4, fixed_abs, tag = 'smem constant byte address 0x4 - core index']
  #allocation1 [shape = 'u32[144,128]{1,0:T(1,128)}', space=vmem, size = 0x12000, scoped, tag = 'internal scratch']
  %s0 = inlined_call_operand.vmem [shape: f32[8,256], index: 0, kind: input, shape index: {}]
  %s1 = inlined_call_operand.hbm [shape: f32[64,256], index: 1, kind: input, shape index: {}]
  %s2 = inlined_call_operand.vmem [shape: f32[1,256], index: 2, kind: input, shape index: {}]
  %s3 = inlined_call_operand.vmem [shape: f32[64,8], index: 3, kind: input, shape index: {}]
  %s4 = inlined_call_operand.hbm [shape: f32[8,64], index: 4, kind: output, shape index: {}]
  %s5 = sld [smem:[#allocation0]]
  $region30: #{tpu_custom_call.1} parent=0
    _
  %s7 = ssub.s32 1, %s5
  %s8 = scalar_select 0, %s7, %s5
  $region1: #{tpu_custom_call.1} parent=0
    #allocation2 [shape = 'u8[65536]{0}', space=vmem, size = 0x10000, scoped, tag = 'input window, operand 1, single buffered']
    #allocation3 [shape = 's32[1]{0}', space=sflag, size = 0x4, scoped, tag = 'scoped memory for tpu_custom_call.1']
    #allocation4 [shape = 's32[1]{0}', space=sflag, size = 0x4, scoped, tag = 'scoped memory for tpu_custom_call.1']
    #allocation5 [shape = 'u8[4096]{0}', space=vmem, size = 0x1000, scoped, tag = 'output window, operand 0, single buffered']
    %9 = vsyncpa [#allocation3], 0
    %10 = vsyncpa [#allocation4], 0
    // Predicated region
    $region2: #{tpu_custom_call.1} parent=1 // pred_check
      _
    $region3: #{tpu_custom_call.1} parent=1 // pred_check_branch
      %12 = sbr.rel (0) target = $region5
    $region4: #{tpu_custom_call.1} parent=1 // pred_region
      _
    $region5: #{tpu_custom_call.1} parent=1 // pred_fallthru
      _
    // Predicated region
    $region6: #{tpu_custom_call.1} parent=1 // pred_check
      _
    $region7: #{tpu_custom_call.1} parent=1 // pred_check_branch
      %14 = sbr.rel (0) target = $region9
    $region8: #{tpu_custom_call.1} parent=1 // pred_region
      %s16 = ssub.s32 2048, 2048
      %17 = vsyncadd [#allocation3], %s16
      %s18 = sshll.u32 [#allocation2], 4
      %s19 = int_to_ptr.vmem [resolvable:$true] %s18
      %24 = dma.hbm_to_vmem [thread:$0]  %s1, 2048, %s19, [#allocation3], 256, 256, 16
    $region9: #{tpu_custom_call.1} parent=1 // pred_fallthru
      _
    // Predicated region
    $region10: #{tpu_custom_call.1} parent=1 // pred_check
      _
    $region11: #{tpu_custom_call.1} parent=1 // pred_check_branch
      %26 = sbr.rel (0) target = $region13
    $region12: #{tpu_custom_call.1} parent=1 // pred_region
      _
    $region13: #{tpu_custom_call.1} parent=1 // pred_fallthru
      _
    // Predicated region
    $region14: #{tpu_custom_call.1} parent=1 // pred_check
      _
    $region15: #{tpu_custom_call.1} parent=1 // pred_check_branch
      %28 = sbr.rel (0) target = $region17
    $region16: #{tpu_custom_call.1} parent=1 // pred_region
      _
    $region17: #{tpu_custom_call.1} parent=1 // pred_fallthru
      _
    // Predicated region
    $region18: #{tpu_custom_call.1} parent=1 // pred_check
      _
    $region19: #{tpu_custom_call.1} parent=1 // pred_check_branch
      %30 = sbr.rel (0) target = $region21
    $region20: #{tpu_custom_call.1} parent=1 // pred_region
      %31 = dma.done [#allocation3], 2048
    $region21: #{tpu_custom_call.1} parent=1 // pred_fallthru
      _
    %v32 = vld [vmem:[%s0] sm:$0xff]
    %v33 = vld [vmem:[%s0 + $0x8] sm:$0xff]
    %v34 = vld [vmem:[#allocation2] sm:$0xff]
    %v35 = vld [vmem:[#allocation2 + $0x8] sm:$0xff]
    %v36 = vld [vmem:[#allocation2 + $0x10] sm:$0xff]
    %v37 = vld [vmem:[#allocation2 + $0x18] sm:$0xff]
    %v38 = vld [vmem:[#allocation2 + $0x20] sm:$0xff]
    %v39 = vld [vmem:[#allocation2 + $0x28] sm:$0xff]
    %v40 = vld [vmem:[#allocation2 + $0x30] sm:$0xff]
    %v41 = vld [vmem:[#allocation2 + $0x38] sm:$0xff]
    %v42 = vld [vmem:[#allocation2 + $0x40] sm:$0xff]
    %v43 = vld [vmem:[#allocation2 + $0x48] sm:$0xff]
    %v44 = vld [vmem:[#allocation2 + $0x50] sm:$0xff]
    %v45 = vld [vmem:[#allocation2 + $0x58] sm:$0xff]
    %v46 = vld [vmem:[#allocation2 + $0x60] sm:$0xff]
    %v47 = vld [vmem:[#allocation2 + $0x68] sm:$0xff]
    %v48 = vld [vmem:[#allocation2 + $0x70] sm:$0xff]
    %v49 = vld [vmem:[#allocation2 + $0x78] sm:$0xff]
    %v50 = vld [vmem:[%s2] sm:$0x3]
    %v51 = vld [vmem:[%s3] sm:$0xff]
    %v52 = vld [vmem:[%s3 + $0x8] sm:$0xff]
    %v53 = vld [vmem:[%s3 + $0x10] sm:$0xff]
    %v54 = vld [vmem:[%s3 + $0x18] sm:$0xff]
    %v55 = vld [vmem:[%s3 + $0x20] sm:$0xff]
    %v56 = vld [vmem:[%s3 + $0x28] sm:$0xff]
    %v57 = vld [vmem:[%s3 + $0x30] sm:$0xff]
    %v58 = vld [vmem:[%s3 + $0x38] sm:$0xff]
    %v60 = vlaneseq
    %v61 = vshrl.u32 %v60, 7
    %v62 = vsub.s32 0, %v61
    %v63 = vrot.slane %v50, %v62
    %v64 = vlaneseq
    %v65 = vshrl.u32 %v64, 7
    %v66 = vsub.s32 1, %v65
    %v67 = vrot.slane %v50, %v66
    %vm70 = vcmask 64512
    %v72 = vsel %vm70, %v51, 0
    %v75 = vsel %vm70, %v52, 0
    %v78 = vsel %vm70, %v53, 0
    %v81 = vsel %vm70, %v54, 0
    %v84 = vsel %vm70, %v55, 0
    %v87 = vsel %vm70, %v56, 0
    %v90 = vsel %vm70, %v57, 0
    %v93 = vsel %vm70, %v58, 0
    %95 = vmatprep.subr.mxu0 0.0
    %96 = vmatpush1.msra.mxu0 0.0
    %97 = vmatprep.subr.mxu0 0.0
    %98 = vmatpush1.msra.mxu0 0.0
    %99 = vmatprep.subr.mxu0 0.0
    %100 = vmatpush1.msra.mxu0 0.0
    %101 = vmatprep.subr.mxu0 0.0
    %102 = vmatpush1.msra.mxu0 0.0
    %103 = vmatprep.subr.mxu0 0.0
    %104 = vmatpush1.msra.mxu0 0.0
    %105 = vmatprep.subr.mxu0 0.0
    %106 = vmatpush1.msra.mxu0 0.0
    %107 = vmatprep.subr.mxu0 0.0
    %108 = vmatpush1.msra.mxu0 0.0
    %109 = vmatprep.subr.mxu0 0.0
    %110 = vmatpush1.msra.mxu0 0.0
    %111 = vmatprep.subr.mxu0 0.0
    %112 = vmatpush1.msra.mxu0 0.0
    %113 = vmatprep.subr.mxu0 0.0
    %114 = vmatpush1.msra.mxu0 0.0
    %115 = vmatprep.subr.mxu0 0.0
    %116 = vmatpush1.msra.mxu0 0.0
    %117 = vmatprep.subr.mxu0 0.0
    %118 = vmatpush1.msra.mxu0 0.0
    %119 = vmatprep.subr.mxu0 0.0
    %120 = vmatpush1.msra.mxu0 0.0
    %121 = vmatprep.subr.mxu0 0.0
    %122 = vmatpush1.msra.mxu0 0.0
    %123 = vmatprep.subr.mxu0 0.0
    %124 = vmatpush1.msra.mxu0 0.0
    %125 = vmatprep.subr.mxu0 %v33
    %126 = vmatpush1.msra.mxu0 %v32
    %127 = vmatprep.subr.mxu0 0.0
    %128 = vmatpush2.msra.mxu0 0.0
    %129 = vmatprep.subr.mxu0 0.0
    %130 = vmatpush2.msra.mxu0 0.0
    %131 = vmatprep.subr.mxu0 0.0
    %132 = vmatpush2.msra.mxu0 0.0
    %133 = vmatprep.subr.mxu0 0.0
    %134 = vmatpush2.msra.mxu0 0.0
    %135 = vmatprep.subr.mxu0 0.0
    %136 = vmatpush2.msra.mxu0 0.0
    %137 = vmatprep.subr.mxu0 0.0
    %138 = vmatpush2.msra.mxu0 0.0
    %139 = vmatprep.subr.mxu0 0.0
    %140 = vmatpush2.msra.mxu0 0.0
    %141 = vmatprep.subr.mxu0 0.0
    %142 = vmatpush2.msra.mxu0 0.0
    %143 = vmatprep.subr.mxu0 0.0
    %144 = vmatpush2.msra.mxu0 0.0
    %145 = vmatprep.subr.mxu0 0.0
    %146 = vmatpush2.msra.mxu0 0.0
    %147 = vmatprep.subr.mxu0 0.0
    %148 = vmatpush2.msra.mxu0 0.0
    %149 = vmatprep.subr.mxu0 0.0
    %150 = vmatpush2.msra.mxu0 0.0
    %151 = vmatprep.subr.mxu0 0.0
    %152 = vmatpush2.msra.mxu0 0.0
    %153 = vmatprep.subr.mxu0 0.0
    %154 = vmatpush2.msra.mxu0 0.0
    %155 = vmatprep.subr.mxu0 0.0
    %156 = vmatpush2.msra.mxu0 0.0
    %157 = vmatprep.subr.mxu0 0.0
    %158 = vmatpush2.msra.mxu0 0.0
    %159 = vmatprep.mubr.f32.mxu0 0.0
    %160 = vmatmul.mubr.f32.gmra.mxu0 %v72
    %v161 = vpop.f32.mrf.mxu0
    %v162 = vadd.f32 %v63, %v161
    %v163 = vpop.f32.mrf.mxu0
    %v164 = vadd.f32 %v67, %v163
    %165 = vmatprep.mubr.f32.mxu0 0.0
    %166 = vmatmul.mubr.f32.gmra.mxu0 %v75
    %v167 = vpop.f32.mrf.mxu0
    %v168 = vadd.f32 %v63, %v167
    %v169 = vpop.f32.mrf.mxu0
    %v170 = vadd.f32 %v67, %v169
    %171 = vmatprep.mubr.f32.mxu0 0.0
    %172 = vmatmul.mubr.f32.gmra.mxu0 %v78
    %v173 = vpop.f32.mrf.mxu0
    %v174 = vadd.f32 %v63, %v173
    %v175 = vpop.f32.mrf.mxu0
    %v176 = vadd.f32 %v67, %v175
    %177 = vmatprep.mubr.f32.mxu0 0.0
    %178 = vmatmul.mubr.f32.gmra.mxu0 %v81
    %v179 = vpop.f32.mrf.mxu0
    %v180 = vadd.f32 %v63, %v179
    %v181 = vpop.f32.mrf.mxu0
    %v182 = vadd.f32 %v67, %v181
    %183 = vmatprep.mubr.f32.mxu0 0.0
    %184 = vmatmul.mubr.f32.gmra.mxu0 %v84
    %v185 = vpop.f32.mrf.mxu0
    %v186 = vadd.f32 %v63, %v185
    %v187 = vpop.f32.mrf.mxu0
    %v188 = vadd.f32 %v67, %v187
    %189 = vmatprep.mubr.f32.mxu0 0.0
    %190 = vmatmul.mubr.f32.gmra.mxu0 %v87
    %v191 = vpop.f32.mrf.mxu0
    %v192 = vadd.f32 %v63, %v191
    %v193 = vpop.f32.mrf.mxu0
    %v194 = vadd.f32 %v67, %v193
    %195 = vmatprep.mubr.f32.mxu0 0.0
    %196 = vmatmul.mubr.f32.gmra.mxu0 %v90
    %v197 = vpop.f32.mrf.mxu0
    %v198 = vadd.f32 %v63, %v197
    %v199 = vpop.f32.mrf.mxu0
    %v200 = vadd.f32 %v67, %v199
    %201 = vmatprep.mubr.f32.mxu0 0.0
    %202 = vmatmul.mubr.f32.gmra.mxu0 %v93
    %v203 = vpop.f32.mrf.mxu0
    %v204 = vadd.f32 %v63, %v203
    %v205 = vpop.f32.mrf.mxu0
    %v206 = vadd.f32 %v67, %v205
    %207 = vdwg.mxu0
    %vm208 = vcmask 523264
    %v210 = vsel %vm208, 0.0, 0
    %212 = vmatprep.subr.mxu0 0.0
    %213 = vmatpush1.msra.mxu0 0.0
    %214 = vmatprep.subr.mxu0 0.0
    %215 = vmatpush1.msra.mxu0 0.0
    %216 = vmatprep.subr.mxu0 0.0
    %217 = vmatpush1.msra.mxu0 0.0
    %218 = vmatprep.subr.mxu0 0.0
    %219 = vmatpush1.msra.mxu0 0.0
    %220 = vmatprep.subr.mxu0 0.0
    %221 = vmatpush1.msra.mxu0 0.0
    %222 = vmatprep.subr.mxu0 0.0
    %223 = vmatpush1.msra.mxu0 0.0
    %224 = vmatprep.subr.mxu0 0.0
    %225 = vmatpush1.msra.mxu0 0.0
    %226 = vmatprep.subr.mxu0 0.0
    %227 = vmatpush1.msra.mxu0 0.0
    %228 = vmatprep.subr.mxu0 %v49
    %229 = vmatpush1.msra.mxu0 %v48
    %230 = vmatprep.subr.mxu0 %v47
    %231 = vmatpush1.msra.mxu0 %v46
    %232 = vmatprep.subr.mxu0 %v45
    %233 = vmatpush1.msra.mxu0 %v44
    %234 = vmatprep.subr.mxu0 %v43
    %235 = vmatpush1.msra.mxu0 %v42
    %236 = vmatprep.subr.mxu0 %v41
    %237 = vmatpush1.msra.mxu0 %v40
    %238 = vmatprep.subr.mxu0 %v39
    %239 = vmatpush1.msra.mxu0 %v38
    %240 = vmatprep.subr.mxu0 %v37
    %241 = vmatpush1.msra.mxu0 %v36
    %242 = vmatprep.subr.mxu0 %v35
    %243 = vmatpush1.msra.mxu0 %v34
    %244 = vmatprep.subr.mxu0 0.0
    %245 = vmatpush2.msra.mxu0 0.0
    %246 = vmatprep.subr.mxu0 0.0
    %247 = vmatpush2.msra.mxu0 0.0
    %248 = vmatprep.subr.mxu0 0.0
    %249 = vmatpush2.msra.mxu0 0.0
    %250 = vmatprep.subr.mxu0 0.0
    %251 = vmatpush2.msra.mxu0 0.0
    %252 = vmatprep.subr.mxu0 0.0
    %253 = vmatpush2.msra.mxu0 0.0
    %254 = vmatprep.subr.mxu0 0.0
    %255 = vmatpush2.msra.mxu0 0.0
    %256 = vmatprep.subr.mxu0 0.0
    %257 = vmatpush2.msra.mxu0 0.0
    %258 = vmatprep.subr.mxu0 0.0
    %259 = vmatpush2.msra.mxu0 0.0
    %260 = vmatprep.subr.mxu0 0.0
    %261 = vmatpush2.msra.mxu0 0.0
    %262 = vmatprep.subr.mxu0 0.0
    %263 = vmatpush2.msra.mxu0 0.0
    %264 = vmatprep.subr.mxu0 0.0
    %265 = vmatpush2.msra.mxu0 0.0
    %266 = vmatprep.subr.mxu0 0.0
    %267 = vmatpush2.msra.mxu0 0.0
    %268 = vmatprep.subr.mxu0 0.0
    %269 = vmatpush2.msra.mxu0 0.0
    %270 = vmatprep.subr.mxu0 0.0
    %271 = vmatpush2.msra.mxu0 0.0
    %272 = vmatprep.subr.mxu0 0.0
    %273 = vmatpush2.msra.mxu0 0.0
    %274 = vmatprep.subr.mxu0 0.0
    %275 = vmatpush2.msra.mxu0 0.0
    %276 = vmatprep.mubr.f32.mxu0 0.0
    %277 = vmatmul.mubr.f32.gmra.mxu0 %v210
    %v278 = vpop.f32.mrf.mxu0
    %v279 = vadd.f32 0.0, %v278
    %v280 = vpop.f32.mrf.mxu0
    %v281 = vadd.f32 0.0, %v280
    %282 = vdwg.mxu0
    %v283 = vadd.f32 %v162, %v279
    %v284 = vadd.f32 %v164, %v281
    %v285 = vxor.u32 %v283, 2147483648
    %v286 = vxor.u32 %v284, 2147483648
    %v287 = vmul.f32 %v285, 1.442695
    %v288 = vpow.pop %v287
    %v289 = vmul.f32 %v286, 1.442695
    %v290 = vpow.pop %v289
    %v291 = vadd.f32 %v288, 1.0
    %v292 = vadd.f32 %v290, 1.0
    %v293 = vrcp.pop %v291
    %v294 = vmul.f32 1.0, %v293
    %v295 = vrcp.pop %v292
    %v296 = vmul.f32 1.0, %v295
    %v297 = vtanh.pop %v284
    %v298 = vmul.f32 %v294, 0.0
    %300 = vrot.lane.b32.xlu0 %v297, 64
    %v301 = vpop.permute.xlu0 %300
    %v303 = vmul.f32 %v294, %v301
    %305 = vrot.lane.b32.xlu0 %v303, 64
    %v306 = vpop.permute.xlu0 %305
    %v308 = vadd.f32 %v298, %v306
    %v309 = vtanh.pop %v308
    %311 = vrot.lane.b32.xlu0 %v309, 64
    %v312 = vpop.permute.xlu0 %311
    %v314 = vmul.f32 %v296, %v312
    %v316 = vsel %vm208, %v314, 0
    %318 = vmatprep.subr.mxu0 0.0
    %319 = vmatpush1.msra.mxu0 0.0
    %320 = vmatprep.subr.mxu0 0.0
    %321 = vmatpush1.msra.mxu0 0.0
    %322 = vmatprep.subr.mxu0 0.0
    %323 = vmatpush1.msra.mxu0 0.0
    %324 = vmatprep.subr.mxu0 0.0
    %325 = vmatpush1.msra.mxu0 0.0
    %326 = vmatprep.subr.mxu0 0.0
    %327 = vmatpush1.msra.mxu0 0.0
    %328 = vmatprep.subr.mxu0 0.0
    %329 = vmatpush1.msra.mxu0 0.0
    %330 = vmatprep.subr.mxu0 0.0
    %331 = vmatpush1.msra.mxu0 0.0
    %332 = vmatprep.subr.mxu0 0.0
    %333 = vmatpush1.msra.mxu0 0.0
    %334 = vmatprep.subr.mxu0 %v49
    %335 = vmatpush1.msra.mxu0 %v48
    %336 = vmatprep.subr.mxu0 %v47
    %337 = vmatpush1.msra.mxu0 %v46
    %338 = vmatprep.subr.mxu0 %v45
    %339 = vmatpush1.msra.mxu0 %v44
    %340 = vmatprep.subr.mxu0 %v43
    %341 = vmatpush1.msra.mxu0 %v42
    %342 = vmatprep.subr.mxu0 %v41
    %343 = vmatpush1.msra.mxu0 %v40
    %344 = vmatprep.subr.mxu0 %v39
    %345 = vmatpush1.msra.mxu0 %v38
    %346 = vmatprep.subr.mxu0 %v37
    %347 = vmatpush1.msra.mxu0 %v36
    %348 = vmatprep.subr.mxu0 %v35
    %349 = vmatpush1.msra.mxu0 %v34
    %350 = vmatprep.subr.mxu0 0.0
    %351 = vmatpush2.msra.mxu0 0.0
    %352 = vmatprep.subr.mxu0 0.0
    %353 = vmatpush2.msra.mxu0 0.0
    %354 = vmatprep.subr.mxu0 0.0
    %355 = vmatpush2.msra.mxu0 0.0
    %356 = vmatprep.subr.mxu0 0.0
    %357 = vmatpush2.msra.mxu0 0.0
    %358 = vmatprep.subr.mxu0 0.0
    %359 = vmatpush2.msra.mxu0 0.0
    %360 = vmatprep.subr.mxu0 0.0
    %361 = vmatpush2.msra.mxu0 0.0
    %362 = vmatprep.subr.mxu0 0.0
    %363 = vmatpush2.msra.mxu0 0.0
    %364 = vmatprep.subr.mxu0 0.0
    %365 = vmatpush2.msra.mxu0 0.0
    %366 = vmatprep.subr.mxu0 0.0
    %367 = vmatpush2.msra.mxu0 0.0
    %368 = vmatprep.subr.mxu0 0.0
    %369 = vmatpush2.msra.mxu0 0.0
    %370 = vmatprep.subr.mxu0 0.0
    %371 = vmatpush2.msra.mxu0 0.0
    %372 = vmatprep.subr.mxu0 0.0
    %373 = vmatpush2.msra.mxu0 0.0
    %374 = vmatprep.subr.mxu0 0.0
    %375 = vmatpush2.msra.mxu0 0.0
    %376 = vmatprep.subr.mxu0 0.0
    %377 = vmatpush2.msra.mxu0 0.0
    %378 = vmatprep.subr.mxu0 0.0
    %379 = vmatpush2.msra.mxu0 0.0
    %380 = vmatprep.subr.mxu0 0.0
    %381 = vmatpush2.msra.mxu0 0.0
    %382 = vmatprep.mubr.f32.mxu0 0.0
    %383 = vmatmul.mubr.f32.gmra.mxu0 %v316
    %v384 = vpop.f32.mrf.mxu0
    %v385 = vadd.f32 0.0, %v384
    %v386 = vpop.f32.mrf.mxu0
    %v387 = vadd.f32 0.0, %v386
    %388 = vdwg.mxu0
    %v389 = vadd.f32 %v168, %v385
    %v390 = vadd.f32 %v170, %v387
    %v391 = vxor.u32 %v389, 2147483648
    %v392 = vxor.u32 %v390, 2147483648
    %v393 = vmul.f32 %v391, 1.442695
    %v394 = vpow.pop %v393
    %v395 = vmul.f32 %v392, 1.442695
    %v396 = vpow.pop %v395
    %v397 = vadd.f32 %v394, 1.0
    %v398 = vadd.f32 %v396, 1.0
    %v399 = vrcp.pop %v397
    %v400 = vmul.f32 1.0, %v399
    %v401 = vrcp.pop %v398
    %v402 = vmul.f32 1.0, %v401
    %v403 = vtanh.pop %v390
    %v404 = vmul.f32 %v400, %v308
    %406 = vrot.lane.b32.xlu0 %v403, 64
    %v407 = vpop.permute.xlu0 %406
    %v409 = vmul.f32 %v400, %v407
    %411 = vrot.lane.b32.xlu0 %v409, 64
    %v412 = vpop.permute.xlu0 %411
    %v414 = vadd.f32 %v404, %v412
    %v415 = vtanh.pop %v414
    %417 = vrot.lane.b32.xlu0 %v415, 64
    %v418 = vpop.permute.xlu0 %417
    %v420 = vmul.f32 %v402, %v418
    %v422 = vsel %vm208, %v420, 0
    %424 = vmatprep.subr.mxu0 0.0
    %425 = vmatpush1.msra.mxu0 0.0
    %426 = vmatprep.subr.mxu0 0.0
    %427 = vmatpush1.msra.mxu0 0.0
    %428 = vmatprep.subr.mxu0 0.0
    %429 = vmatpush1.msra.mxu0 0.0
    %430 = vmatprep.subr.mxu0 0.0
    %431 = vmatpush1.msra.mxu0 0.0
    %432 = vmatprep.subr.mxu0 0.0
    %433 = vmatpush1.msra.mxu0 0.0
    %434 = vmatprep.subr.mxu0 0.0
    %435 = vmatpush1.msra.mxu0 0.0
    %436 = vmatprep.subr.mxu0 0.0
    %437 = vmatpush1.msra.mxu0 0.0
    %438 = vmatprep.subr.mxu0 0.0
    %439 = vmatpush1.msra.mxu0 0.0
    %440 = vmatprep.subr.mxu0 %v49
    %441 = vmatpush1.msra.mxu0 %v48
    %442 = vmatprep.subr.mxu0 %v47
    %443 = vmatpush1.msra.mxu0 %v46
    %444 = vmatprep.subr.mxu0 %v45
    %445 = vmatpush1.msra.mxu0 %v44
    %446 = vmatprep.subr.mxu0 %v43
    %447 = vmatpush1.msra.mxu0 %v42
    %448 = vmatprep.subr.mxu0 %v41
    %449 = vmatpush1.msra.mxu0 %v40
    %450 = vmatprep.subr.mxu0 %v39
    %451 = vmatpush1.msra.mxu0 %v38
    %452 = vmatprep.subr.mxu0 %v37
    %453 = vmatpush1.msra.mxu0 %v36
    %454 = vmatprep.subr.mxu0 %v35
    %455 = vmatpush1.msra.mxu0 %v34
    %456 = vmatprep.subr.mxu0 0.0
    %457 = vmatpush2.msra.mxu0 0.0
    %458 = vmatprep.subr.mxu0 0.0
    %459 = vmatpush2.msra.mxu0 0.0
    %460 = vmatprep.subr.mxu0 0.0
    %461 = vmatpush2.msra.mxu0 0.0
    %462 = vmatprep.subr.mxu0 0.0
    %463 = vmatpush2.msra.mxu0 0.0
    %464 = vmatprep.subr.mxu0 0.0
    %465 = vmatpush2.msra.mxu0 0.0
    %466 = vmatprep.subr.mxu0 0.0
    %467 = vmatpush2.msra.mxu0 0.0
    %468 = vmatprep.subr.mxu0 0.0
    %469 = vmatpush2.msra.mxu0 0.0
    %470 = vmatprep.subr.mxu0 0.0
    %471 = vmatpush2.msra.mxu0 0.0
    %472 = vmatprep.subr.mxu0 0.0
    %473 = vmatpush2.msra.mxu0 0.0
    %474 = vmatprep.subr.mxu0 0.0
    %475 = vmatpush2.msra.mxu0 0.0
    %476 = vmatprep.subr.mxu0 0.0
    %477 = vmatpush2.msra.mxu0 0.0
    %478 = vmatprep.subr.mxu0 0.0
    %479 = vmatpush2.msra.mxu0 0.0
    %480 = vmatprep.subr.mxu0 0.0
    %481 = vmatpush2.msra.mxu0 0.0
    %482 = vmatprep.subr.mxu0 0.0
    %483 = vmatpush2.msra.mxu0 0.0
    %484 = vmatprep.subr.mxu0 0.0
    %485 = vmatpush2.msra.mxu0 0.0
    %486 = vmatprep.subr.mxu0 0.0
    %487 = vmatpush2.msra.mxu0 0.0
    %488 = vmatprep.mubr.f32.mxu0 0.0
    %489 = vmatmul.mubr.f32.gmra.mxu0 %v422
    %v490 = vpop.f32.mrf.mxu0
    %v491 = vadd.f32 0.0, %v490
    %v492 = vpop.f32.mrf.mxu0
    %v493 = vadd.f32 0.0, %v492
    %494 = vdwg.mxu0
    %v495 = vadd.f32 %v174, %v491
    %v496 = vadd.f32 %v176, %v493
    %v497 = vxor.u32 %v495, 2147483648
    %v498 = vxor.u32 %v496, 2147483648
    %v499 = vmul.f32 %v497, 1.442695
    %v500 = vpow.pop %v499
    %v501 = vmul.f32 %v498, 1.442695
    %v502 = vpow.pop %v501
    %v503 = vadd.f32 %v500, 1.0
    %v504 = vadd.f32 %v502, 1.0
    %v505 = vrcp.pop %v503
    %v506 = vmul.f32 1.0, %v505
    %v507 = vrcp.pop %v504
    %v508 = vmul.f32 1.0, %v507
    %v509 = vtanh.pop %v496
    %v510 = vmul.f32 %v506, %v414
    %512 = vrot.lane.b32.xlu0 %v509, 64
    %v513 = vpop.permute.xlu0 %512
    %v515 = vmul.f32 %v506, %v513
    %517 = vrot.lane.b32.xlu0 %v515, 64
    %v518 = vpop.permute.xlu0 %517
    %v520 = vadd.f32 %v510, %v518
    %v521 = vtanh.pop %v520
    %523 = vrot.lane.b32.xlu0 %v521, 64
    %v524 = vpop.permute.xlu0 %523
    %v526 = vmul.f32 %v508, %v524
    %v528 = vsel %vm208, %v526, 0
    %530 = vmatprep.subr.mxu0 0.0
    %531 = vmatpush1.msra.mxu0 0.0
    %532 = vmatprep.subr.mxu0 0.0
    %533 = vmatpush1.msra.mxu0 0.0
    %534 = vmatprep.subr.mxu0 0.0
    %535 = vmatpush1.msra.mxu0 0.0
    %536 = vmatprep.subr.mxu0 0.0
    %537 = vmatpush1.msra.mxu0 0.0
    %538 = vmatprep.subr.mxu0 0.0
    %539 = vmatpush1.msra.mxu0 0.0
    %540 = vmatprep.subr.mxu0 0.0
    %541 = vmatpush1.msra.mxu0 0.0
    %542 = vmatprep.subr.mxu0 0.0
    %543 = vmatpush1.msra.mxu0 0.0
    %544 = vmatprep.subr.mxu0 0.0
    %545 = vmatpush1.msra.mxu0 0.0
    %546 = vmatprep.subr.mxu0 %v49
    %547 = vmatpush1.msra.mxu0 %v48
    %548 = vmatprep.subr.mxu0 %v47
    %549 = vmatpush1.msra.mxu0 %v46
    %550 = vmatprep.subr.mxu0 %v45
    %551 = vmatpush1.msra.mxu0 %v44
    %552 = vmatprep.subr.mxu0 %v43
    %553 = vmatpush1.msra.mxu0 %v42
    %554 = vmatprep.subr.mxu0 %v41
    %555 = vmatpush1.msra.mxu0 %v40
    %556 = vmatprep.subr.mxu0 %v39
    %557 = vmatpush1.msra.mxu0 %v38
    %558 = vmatprep.subr.mxu0 %v37
    %559 = vmatpush1.msra.mxu0 %v36
    %560 = vmatprep.subr.mxu0 %v35
    %561 = vmatpush1.msra.mxu0 %v34
    %562 = vmatprep.subr.mxu0 0.0
    %563 = vmatpush2.msra.mxu0 0.0
    %564 = vmatprep.subr.mxu0 0.0
    %565 = vmatpush2.msra.mxu0 0.0
    %566 = vmatprep.subr.mxu0 0.0
    %567 = vmatpush2.msra.mxu0 0.0
    %568 = vmatprep.subr.mxu0 0.0
    %569 = vmatpush2.msra.mxu0 0.0
    %570 = vmatprep.subr.mxu0 0.0
    %571 = vmatpush2.msra.mxu0 0.0
    %572 = vmatprep.subr.mxu0 0.0
    %573 = vmatpush2.msra.mxu0 0.0
    %574 = vmatprep.subr.mxu0 0.0
    %575 = vmatpush2.msra.mxu0 0.0
    %576 = vmatprep.subr.mxu0 0.0
    %577 = vmatpush2.msra.mxu0 0.0
    %578 = vmatprep.subr.mxu0 0.0
    %579 = vmatpush2.msra.mxu0 0.0
    %580 = vmatprep.subr.mxu0 0.0
    %581 = vmatpush2.msra.mxu0 0.0
    %582 = vmatprep.subr.mxu0 0.0
    %583 = vmatpush2.msra.mxu0 0.0
    %584 = vmatprep.subr.mxu0 0.0
    %585 = vmatpush2.msra.mxu0 0.0
    %586 = vmatprep.subr.mxu0 0.0
    %587 = vmatpush2.msra.mxu0 0.0
    %588 = vmatprep.subr.mxu0 0.0
    %589 = vmatpush2.msra.mxu0 0.0
    %590 = vmatprep.subr.mxu0 0.0
    %591 = vmatpush2.msra.mxu0 0.0
    %592 = vmatprep.subr.mxu0 0.0
    %593 = vmatpush2.msra.mxu0 0.0
    %594 = vmatprep.mubr.f32.mxu0 0.0
    %595 = vmatmul.mubr.f32.gmra.mxu0 %v528
    %v596 = vpop.f32.mrf.mxu0
    %v597 = vadd.f32 0.0, %v596
    %v598 = vpop.f32.mrf.mxu0
    %v599 = vadd.f32 0.0, %v598
    %600 = vdwg.mxu0
    %v601 = vadd.f32 %v180, %v597
    %v602 = vadd.f32 %v182, %v599
    %v603 = vxor.u32 %v601, 2147483648
    %v604 = vxor.u32 %v602, 2147483648
    %v605 = vmul.f32 %v603, 1.442695
    %v606 = vpow.pop %v605
    %v607 = vmul.f32 %v604, 1.442695
    %v608 = vpow.pop %v607
    %v609 = vadd.f32 %v606, 1.0
    %v610 = vadd.f32 %v608, 1.0
    %v611 = vrcp.pop %v609
    %v612 = vmul.f32 1.0, %v611
    %v613 = vrcp.pop %v610
    %v614 = vmul.f32 1.0, %v613
    %v615 = vtanh.pop %v602
    %v616 = vmul.f32 %v612, %v520
    %618 = vrot.lane.b32.xlu0 %v615, 64
    %v619 = vpop.permute.xlu0 %618
    %v621 = vmul.f32 %v612, %v619
    %623 = vrot.lane.b32.xlu0 %v621, 64
    %v624 = vpop.permute.xlu0 %623
    %v626 = vadd.f32 %v616, %v624
    %v627 = vtanh.pop %v626
    %629 = vrot.lane.b32.xlu0 %v627, 64
    %v630 = vpop.permute.xlu0 %629
    %v632 = vmul.f32 %v614, %v630
    %v634 = vsel %vm208, %v632, 0
    %636 = vmatprep.subr.mxu0 0.0
    %637 = vmatpush1.msra.mxu0 0.0
    %638 = vmatprep.subr.mxu0 0.0
    %639 = vmatpush1.msra.mxu0 0.0
    %640 = vmatprep.subr.mxu0 0.0
    %641 = vmatpush1.msra.mxu0 0.0
    %642 = vmatprep.subr.mxu0 0.0
    %643 = vmatpush1.msra.mxu0 0.0
    %644 = vmatprep.subr.mxu0 0.0
    %645 = vmatpush1.msra.mxu0 0.0
    %646 = vmatprep.subr.mxu0 0.0
    %647 = vmatpush1.msra.mxu0 0.0
    %648 = vmatprep.subr.mxu0 0.0
    %649 = vmatpush1.msra.mxu0 0.0
    %650 = vmatprep.subr.mxu0 0.0
    %651 = vmatpush1.msra.mxu0 0.0
    %652 = vmatprep.subr.mxu0 %v49
    %653 = vmatpush1.msra.mxu0 %v48
    %654 = vmatprep.subr.mxu0 %v47
    %655 = vmatpush1.msra.mxu0 %v46
    %656 = vmatprep.subr.mxu0 %v45
    %657 = vmatpush1.msra.mxu0 %v44
    %658 = vmatprep.subr.mxu0 %v43
    %659 = vmatpush1.msra.mxu0 %v42
    %660 = vmatprep.subr.mxu0 %v41
    %661 = vmatpush1.msra.mxu0 %v40
    %662 = vmatprep.subr.mxu0 %v39
    %663 = vmatpush1.msra.mxu0 %v38
    %664 = vmatprep.subr.mxu0 %v37
    %665 = vmatpush1.msra.mxu0 %v36
    %666 = vmatprep.subr.mxu0 %v35
    %667 = vmatpush1.msra.mxu0 %v34
    %668 = vmatprep.subr.mxu0 0.0
    %669 = vmatpush2.msra.mxu0 0.0
    %670 = vmatprep.subr.mxu0 0.0
    %671 = vmatpush2.msra.mxu0 0.0
    %672 = vmatprep.subr.mxu0 0.0
    %673 = vmatpush2.msra.mxu0 0.0
    %674 = vmatprep.subr.mxu0 0.0
    %675 = vmatpush2.msra.mxu0 0.0
    %676 = vmatprep.subr.mxu0 0.0
    %677 = vmatpush2.msra.mxu0 0.0
    %678 = vmatprep.subr.mxu0 0.0
    %679 = vmatpush2.msra.mxu0 0.0
    %680 = vmatprep.subr.mxu0 0.0
    %681 = vmatpush2.msra.mxu0 0.0
    %682 = vmatprep.subr.mxu0 0.0
    %683 = vmatpush2.msra.mxu0 0.0
    %684 = vmatprep.subr.mxu0 0.0
    %685 = vmatpush2.msra.mxu0 0.0
    %686 = vmatprep.subr.mxu0 0.0
    %687 = vmatpush2.msra.mxu0 0.0
    %688 = vmatprep.subr.mxu0 0.0
    %689 = vmatpush2.msra.mxu0 0.0
    %690 = vmatprep.subr.mxu0 0.0
    %691 = vmatpush2.msra.mxu0 0.0
    %692 = vmatprep.subr.mxu0 0.0
    %693 = vmatpush2.msra.mxu0 0.0
    %694 = vmatprep.subr.mxu0 0.0
    %695 = vmatpush2.msra.mxu0 0.0
    %696 = vmatprep.subr.mxu0 0.0
    %697 = vmatpush2.msra.mxu0 0.0
    %698 = vmatprep.subr.mxu0 0.0
    %699 = vmatpush2.msra.mxu0 0.0
    %700 = vmatprep.mubr.f32.mxu0 0.0
    %701 = vmatmul.mubr.f32.gmra.mxu0 %v634
    %v702 = vpop.f32.mrf.mxu0
    %v703 = vadd.f32 0.0, %v702
    %v704 = vpop.f32.mrf.mxu0
    %v705 = vadd.f32 0.0, %v704
    %706 = vdwg.mxu0
    %v707 = vadd.f32 %v186, %v703
    %v708 = vadd.f32 %v188, %v705
    %v709 = vxor.u32 %v707, 2147483648
    %v710 = vxor.u32 %v708, 2147483648
    %v711 = vmul.f32 %v709, 1.442695
    %v712 = vpow.pop %v711
    %v713 = vmul.f32 %v710, 1.442695
    %v714 = vpow.pop %v713
    %v715 = vadd.f32 %v712, 1.0
    %v716 = vadd.f32 %v714, 1.0
    %v717 = vrcp.pop %v715
    %v718 = vmul.f32 1.0, %v717
    %v719 = vrcp.pop %v716
    %v720 = vmul.f32 1.0, %v719
    %v721 = vtanh.pop %v708
    %v722 = vmul.f32 %v718, %v626
    %724 = vrot.lane.b32.xlu0 %v721, 64
    %v725 = vpop.permute.xlu0 %724
    %v727 = vmul.f32 %v718, %v725
    %729 = vrot.lane.b32.xlu0 %v727, 64
    %v730 = vpop.permute.xlu0 %729
    %v732 = vadd.f32 %v722, %v730
    %v733 = vtanh.pop %v732
    %735 = vrot.lane.b32.xlu0 %v733, 64
    %v736 = vpop.permute.xlu0 %735
    %v738 = vmul.f32 %v720, %v736
    %v740 = vsel %vm208, %v738, 0
    %742 = vmatprep.subr.mxu0 0.0
    %743 = vmatpush1.msra.mxu0 0.0
    %744 = vmatprep.subr.mxu0 0.0
    %745 = vmatpush1.msra.mxu0 0.0
    %746 = vmatprep.subr.mxu0 0.0
    %747 = vmatpush1.msra.mxu0 0.0
    %748 = vmatprep.subr.mxu0 0.0
    %749 = vmatpush1.msra.mxu0 0.0
    %750 = vmatprep.subr.mxu0 0.0
    %751 = vmatpush1.msra.mxu0 0.0
    %752 = vmatprep.subr.mxu0 0.0
    %753 = vmatpush1.msra.mxu0 0.0
    %754 = vmatprep.subr.mxu0 0.0
    %755 = vmatpush1.msra.mxu0 0.0
    %756 = vmatprep.subr.mxu0 0.0
    %757 = vmatpush1.msra.mxu0 0.0
    %758 = vmatprep.subr.mxu0 %v49
    %759 = vmatpush1.msra.mxu0 %v48
    %760 = vmatprep.subr.mxu0 %v47
    %761 = vmatpush1.msra.mxu0 %v46
    %762 = vmatprep.subr.mxu0 %v45
    %763 = vmatpush1.msra.mxu0 %v44
    %764 = vmatprep.subr.mxu0 %v43
    %765 = vmatpush1.msra.mxu0 %v42
    %766 = vmatprep.subr.mxu0 %v41
    %767 = vmatpush1.msra.mxu0 %v40
    %768 = vmatprep.subr.mxu0 %v39
    %769 = vmatpush1.msra.mxu0 %v38
    %770 = vmatprep.subr.mxu0 %v37
    %771 = vmatpush1.msra.mxu0 %v36
    %772 = vmatprep.subr.mxu0 %v35
    %773 = vmatpush1.msra.mxu0 %v34
    %774 = vmatprep.subr.mxu0 0.0
    %775 = vmatpush2.msra.mxu0 0.0
    %776 = vmatprep.subr.mxu0 0.0
    %777 = vmatpush2.msra.mxu0 0.0
    %778 = vmatprep.subr.mxu0 0.0
    %779 = vmatpush2.msra.mxu0 0.0
    %780 = vmatprep.subr.mxu0 0.0
    %781 = vmatpush2.msra.mxu0 0.0
    %782 = vmatprep.subr.mxu0 0.0
    %783 = vmatpush2.msra.mxu0 0.0
    %784 = vmatprep.subr.mxu0 0.0
    %785 = vmatpush2.msra.mxu0 0.0
    %786 = vmatprep.subr.mxu0 0.0
    %787 = vmatpush2.msra.mxu0 0.0
    %788 = vmatprep.subr.mxu0 0.0
    %789 = vmatpush2.msra.mxu0 0.0
    %790 = vmatprep.subr.mxu0 0.0
    %791 = vmatpush2.msra.mxu0 0.0
    %792 = vmatprep.subr.mxu0 0.0
    %793 = vmatpush2.msra.mxu0 0.0
    %794 = vmatprep.subr.mxu0 0.0
    %795 = vmatpush2.msra.mxu0 0.0
    %796 = vmatprep.subr.mxu0 0.0
    %797 = vmatpush2.msra.mxu0 0.0
    %798 = vmatprep.subr.mxu0 0.0
    %799 = vmatpush2.msra.mxu0 0.0
    %800 = vmatprep.subr.mxu0 0.0
    %801 = vmatpush2.msra.mxu0 0.0
    %802 = vmatprep.subr.mxu0 0.0
    %803 = vmatpush2.msra.mxu0 0.0
    %804 = vmatprep.subr.mxu0 0.0
    %805 = vmatpush2.msra.mxu0 0.0
    %806 = vmatprep.mubr.f32.mxu0 0.0
    %807 = vmatmul.mubr.f32.gmra.mxu0 %v740
    %v808 = vpop.f32.mrf.mxu0
    %v809 = vadd.f32 0.0, %v808
    %v810 = vpop.f32.mrf.mxu0
    %v811 = vadd.f32 0.0, %v810
    %812 = vdwg.mxu0
    %v813 = vadd.f32 %v192, %v809
    %v814 = vadd.f32 %v194, %v811
    %v815 = vxor.u32 %v813, 2147483648
    %v816 = vxor.u32 %v814, 2147483648
    %v817 = vmul.f32 %v815, 1.442695
    %v818 = vpow.pop %v817
    %v819 = vmul.f32 %v816, 1.442695
    %v820 = vpow.pop %v819
    %v821 = vadd.f32 %v818, 1.0
    %v822 = vadd.f32 %v820, 1.0
    %v823 = vrcp.pop %v821
    %v824 = vmul.f32 1.0, %v823
    %v825 = vrcp.pop %v822
    %v826 = vmul.f32 1.0, %v825
    %v827 = vtanh.pop %v814
    %v828 = vmul.f32 %v824, %v732
    %830 = vrot.lane.b32.xlu0 %v827, 64
    %v831 = vpop.permute.xlu0 %830
    %v833 = vmul.f32 %v824, %v831
    %835 = vrot.lane.b32.xlu0 %v833, 64
    %v836 = vpop.permute.xlu0 %835
    %v838 = vadd.f32 %v828, %v836
    %v839 = vtanh.pop %v838
    %841 = vrot.lane.b32.xlu0 %v839, 64
    %v842 = vpop.permute.xlu0 %841
    %v844 = vmul.f32 %v826, %v842
    %v846 = vsel %vm208, %v844, 0
    %848 = vmatprep.subr.mxu0 0.0
    %849 = vmatpush1.msra.mxu0 0.0
    %850 = vmatprep.subr.mxu0 0.0
    %851 = vmatpush1.msra.mxu0 0.0
    %852 = vmatprep.subr.mxu0 0.0
    %853 = vmatpush1.msra.mxu0 0.0
    %854 = vmatprep.subr.mxu0 0.0
    %855 = vmatpush1.msra.mxu0 0.0
    %856 = vmatprep.subr.mxu0 0.0
    %857 = vmatpush1.msra.mxu0 0.0
    %858 = vmatprep.subr.mxu0 0.0
    %859 = vmatpush1.msra.mxu0 0.0
    %860 = vmatprep.subr.mxu0 0.0
    %861 = vmatpush1.msra.mxu0 0.0
    %862 = vmatprep.subr.mxu0 0.0
    %863 = vmatpush1.msra.mxu0 0.0
    %864 = vmatprep.subr.mxu0 %v49
    %865 = vmatpush1.msra.mxu0 %v48
    %866 = vmatprep.subr.mxu0 %v47
    %867 = vmatpush1.msra.mxu0 %v46
    %868 = vmatprep.subr.mxu0 %v45
    %869 = vmatpush1.msra.mxu0 %v44
    %870 = vmatprep.subr.mxu0 %v43
    %871 = vmatpush1.msra.mxu0 %v42
    %872 = vmatprep.subr.mxu0 %v41
    %873 = vmatpush1.msra.mxu0 %v40
    %874 = vmatprep.subr.mxu0 %v39
    %875 = vmatpush1.msra.mxu0 %v38
    %876 = vmatprep.subr.mxu0 %v37
    %877 = vmatpush1.msra.mxu0 %v36
    %878 = vmatprep.subr.mxu0 %v35
    %879 = vmatpush1.msra.mxu0 %v34
    %880 = vmatprep.subr.mxu0 0.0
    %881 = vmatpush2.msra.mxu0 0.0
    %882 = vmatprep.subr.mxu0 0.0
    %883 = vmatpush2.msra.mxu0 0.0
    %884 = vmatprep.subr.mxu0 0.0
    %885 = vmatpush2.msra.mxu0 0.0
    %886 = vmatprep.subr.mxu0 0.0
    %887 = vmatpush2.msra.mxu0 0.0
    %888 = vmatprep.subr.mxu0 0.0
    %889 = vmatpush2.msra.mxu0 0.0
    %890 = vmatprep.subr.mxu0 0.0
    %891 = vmatpush2.msra.mxu0 0.0
    %892 = vmatprep.subr.mxu0 0.0
    %893 = vmatpush2.msra.mxu0 0.0
    %894 = vmatprep.subr.mxu0 0.0
    %895 = vmatpush2.msra.mxu0 0.0
    %896 = vmatprep.subr.mxu0 0.0
    %897 = vmatpush2.msra.mxu0 0.0
    %898 = vmatprep.subr.mxu0 0.0
    %899 = vmatpush2.msra.mxu0 0.0
    %900 = vmatprep.subr.mxu0 0.0
    %901 = vmatpush2.msra.mxu0 0.0
    %902 = vmatprep.subr.mxu0 0.0
    %903 = vmatpush2.msra.mxu0 0.0
    %904 = vmatprep.subr.mxu0 0.0
    %905 = vmatpush2.msra.mxu0 0.0
    %906 = vmatprep.subr.mxu0 0.0
    %907 = vmatpush2.msra.mxu0 0.0
    %908 = vmatprep.subr.mxu0 0.0
    %909 = vmatpush2.msra.mxu0 0.0
    %910 = vmatprep.subr.mxu0 0.0
    %911 = vmatpush2.msra.mxu0 0.0
    %912 = vmatprep.mubr.f32.mxu0 0.0
    %913 = vmatmul.mubr.f32.gmra.mxu0 %v846
    %v914 = vpop.f32.mrf.mxu0
    %v915 = vadd.f32 0.0, %v914
    %v916 = vpop.f32.mrf.mxu0
    %v917 = vadd.f32 0.0, %v916
    %918 = vdwg.mxu0
    %v919 = vadd.f32 %v198, %v915
    %v920 = vadd.f32 %v200, %v917
    %v921 = vxor.u32 %v919, 2147483648
    %v922 = vxor.u32 %v920, 2147483648
    %v923 = vmul.f32 %v921, 1.442695
    %v924 = vpow.pop %v923
    %v925 = vmul.f32 %v922, 1.442695
    %v926 = vpow.pop %v925
    %v927 = vadd.f32 %v924, 1.0
    %v928 = vadd.f32 %v926, 1.0
    %v929 = vrcp.pop %v927
    %v930 = vmul.f32 1.0, %v929
    %v931 = vrcp.pop %v928
    %v932 = vmul.f32 1.0, %v931
    %v933 = vtanh.pop %v920
    %v934 = vmul.f32 %v930, %v838
    %936 = vrot.lane.b32.xlu0 %v933, 64
    %v937 = vpop.permute.xlu0 %936
    %v939 = vmul.f32 %v930, %v937
    %941 = vrot.lane.b32.xlu0 %v939, 64
    %v942 = vpop.permute.xlu0 %941
    %v944 = vadd.f32 %v934, %v942
    %v945 = vtanh.pop %v944
    %947 = vrot.lane.b32.xlu0 %v945, 64
    %v948 = vpop.permute.xlu0 %947
    %v950 = vmul.f32 %v932, %v948
    %v952 = vsel %vm208, %v950, 0
    %954 = vmatprep.subr.mxu0 0.0
    %955 = vmatpush1.msra.mxu0 0.0
    %956 = vmatprep.subr.mxu0 0.0
    %957 = vmatpush1.msra.mxu0 0.0
    %958 = vmatprep.subr.mxu0 0.0
    %959 = vmatpush1.msra.mxu0 0.0
    %960 = vmatprep.subr.mxu0 0.0
    %961 = vmatpush1.msra.mxu0 0.0
    %962 = vmatprep.subr.mxu0 0.0
    %963 = vmatpush1.msra.mxu0 0.0
    %964 = vmatprep.subr.mxu0 0.0
    %965 = vmatpush1.msra.mxu0 0.0
    %966 = vmatprep.subr.mxu0 0.0
    %967 = vmatpush1.msra.mxu0 0.0
    %968 = vmatprep.subr.mxu0 0.0
    %969 = vmatpush1.msra.mxu0 0.0
    %970 = vmatprep.subr.mxu0 %v49
    %971 = vmatpush1.msra.mxu0 %v48
    %972 = vmatprep.subr.mxu0 %v47
    %973 = vmatpush1.msra.mxu0 %v46
    %974 = vmatprep.subr.mxu0 %v45
    %975 = vmatpush1.msra.mxu0 %v44
    %976 = vmatprep.subr.mxu0 %v43
    %977 = vmatpush1.msra.mxu0 %v42
    %978 = vmatprep.subr.mxu0 %v41
    %979 = vmatpush1.msra.mxu0 %v40
    %980 = vmatprep.subr.mxu0 %v39
    %981 = vmatpush1.msra.mxu0 %v38
    %982 = vmatprep.subr.mxu0 %v37
    %983 = vmatpush1.msra.mxu0 %v36
    %984 = vmatprep.subr.mxu0 %v35
    %985 = vmatpush1.msra.mxu0 %v34
    %986 = vmatprep.subr.mxu0 0.0
    %987 = vmatpush2.msra.mxu0 0.0
    %988 = vmatprep.subr.mxu0 0.0
    %989 = vmatpush2.msra.mxu0 0.0
    %990 = vmatprep.subr.mxu0 0.0
    %991 = vmatpush2.msra.mxu0 0.0
    %992 = vmatprep.subr.mxu0 0.0
    %993 = vmatpush2.msra.mxu0 0.0
    %994 = vmatprep.subr.mxu0 0.0
    %995 = vmatpush2.msra.mxu0 0.0
    %996 = vmatprep.subr.mxu0 0.0
    %997 = vmatpush2.msra.mxu0 0.0
    %998 = vmatprep.subr.mxu0 0.0
    %999 = vmatpush2.msra.mxu0 0.0
    %1000 = vmatprep.subr.mxu0 0.0
    %1001 = vmatpush2.msra.mxu0 0.0
    %1002 = vmatprep.subr.mxu0 0.0
    %1003 = vmatpush2.msra.mxu0 0.0
    %1004 = vmatprep.subr.mxu0 0.0
    %1005 = vmatpush2.msra.mxu0 0.0
    %1006 = vmatprep.subr.mxu0 0.0
    %1007 = vmatpush2.msra.mxu0 0.0
    %1008 = vmatprep.subr.mxu0 0.0
    %1009 = vmatpush2.msra.mxu0 0.0
    %1010 = vmatprep.subr.mxu0 0.0
    %1011 = vmatpush2.msra.mxu0 0.0
    %1012 = vmatprep.subr.mxu0 0.0
    %1013 = vmatpush2.msra.mxu0 0.0
    %1014 = vmatprep.subr.mxu0 0.0
    %1015 = vmatpush2.msra.mxu0 0.0
    %1016 = vmatprep.subr.mxu0 0.0
    %1017 = vmatpush2.msra.mxu0 0.0
    %1018 = vmatprep.mubr.f32.mxu0 0.0
    %1019 = vmatmul.mubr.f32.gmra.mxu0 %v952
    %v1020 = vpop.f32.mrf.mxu0
    %v1021 = vadd.f32 0.0, %v1020
    %v1022 = vpop.f32.mrf.mxu0
    %v1023 = vadd.f32 0.0, %v1022
    %1024 = vdwg.mxu0
    %v1025 = vadd.f32 %v204, %v1021
    %v1026 = vadd.f32 %v206, %v1023
    %v1027 = vxor.u32 %v1025, 2147483648
    %v1028 = vxor.u32 %v1026, 2147483648
    %v1029 = vmul.f32 %v1027, 1.442695
    %v1030 = vpow.pop %v1029
    %v1031 = vmul.f32 %v1028, 1.442695
    %v1032 = vpow.pop %v1031
    %v1033 = vadd.f32 %v1030, 1.0
    %v1034 = vadd.f32 %v1032, 1.0
    %v1035 = vrcp.pop %v1033
    %v1036 = vmul.f32 1.0, %v1035
    %v1037 = vrcp.pop %v1034
    %v1038 = vmul.f32 1.0, %v1037
    %v1039 = vtanh.pop %v1026
    %v1040 = vmul.f32 %v1036, %v944
    %1042 = vrot.lane.b32.xlu0 %v1039, 64
    %v1043 = vpop.permute.xlu0 %1042
    %v1045 = vmul.f32 %v1036, %v1043
    %1047 = vrot.lane.b32.xlu0 %v1045, 64
    %v1048 = vpop.permute.xlu0 %1047
    %v1050 = vadd.f32 %v1040, %v1048
    %v1051 = vtanh.pop %v1050
    %1053 = vrot.lane.b32.xlu0 %v1051, 64
    %v1054 = vpop.permute.xlu0 %1053
    %v1056 = vmul.f32 %v1038, %v1054
    %1057 = vst.msk [vmem:[#allocation5] sm:$0xff] %vm208, %v1056
    // Predicated region
    $region22: #{tpu_custom_call.1} parent=1 // pred_check
      _
    $region23: #{tpu_custom_call.1} parent=1 // pred_check_branch
      %1059 = sbr.rel (0) target = $region25
    $region24: #{tpu_custom_call.1} parent=1 // pred_region
      %s1061 = ssub.s32 128, 128
      %1062 = vsyncadd [#allocation4], %s1061
      %s1064 = sshll.u32 [#allocation5], 4
      %s1065 = int_to_ptr.vmem [resolvable:$true] %s1064
      %1067 = dma.vmem_to_hbm [thread:$0]  %s1065, 128, %s4, [#allocation4]
    $region25: #{tpu_custom_call.1} parent=1 // pred_fallthru
      _
    // Predicated region
    $region26: #{tpu_custom_call.1} parent=1 // pred_check
      _
    $region27: #{tpu_custom_call.1} parent=1 // pred_check_branch
      %1069 = sbr.rel (0) target = $region29
    $region28: #{tpu_custom_call.1} parent=1 // pred_region
      %1070 = dma.done [#allocation4], 128
    $region29: #{tpu_custom_call.1} parent=1 // pred_fallthru
      _
    %1071 = vsyncpa [#allocation3], 1
    %1072 = vsyncpa [#allocation4], 1

</llo_original>
